<compile_context>
chip_gen: v5e
topology: v5e:2x2
jax: 0.10.0
libtpu: 0.0.40
codegen_flags: <defaults>
</compile_context>

<pallas_src>
import functools

import jax
import jax.numpy as jnp
from jax.experimental import pallas as pl
from jax.experimental.pallas import tpu as pltpu


def generator_kernel(x_ref, w1_ref, b1_ref, w2_ref, b2_ref, o_ref, *, slope):
    # hidden = LeakyReLU(x @ W1 + b1), accumulated in f32 on the MXU.
    h = jnp.dot(x_ref[...], w1_ref[...], preferred_element_type=jnp.float32)
    h = h + b1_ref[...]                        # (TB, H) + (1, H) broadcast, f32
    if 0.0 <= slope <= 1.0:
        h = jnp.maximum(h, slope * h)          # single VALU max
    else:
        h = jnp.where(h >= 0, h, slope * h)    # exact form for other slopes
    # out = tanh(hidden @ W2 + b2); cast hidden back to the MXU compute dtype.
    h = h.astype(w2_ref.dtype)
    o = jnp.dot(h, w2_ref[...], preferred_element_type=jnp.float32)
    o = o + b2_ref[...]                        # (TB, O) + (1, O) broadcast, f32
    # f32 tanh (EUP); cast only at the final store (bf16 by default).
    o_ref[...] = jnp.tanh(o).astype(o_ref.dtype)


def _round_up(n, m):
    return ((n + m - 1) // m) * m


def _choose_batch_tile(B, *, max_tile=2048, min_tile=512, target_steps=6):
    """Pick the batch tile.

    Small batches run as a single step (fixed launch cost dominates anyway).
    Large batches target ~`target_steps` grid steps so (a) v7x's two
    TensorCores each get >= 2-3 steps and (b) the output-writeback DMA of
    step i-1 / the x prefetch of step i+1 overlap step i's compute, while
    keeping TB >= min_tile (per-grid-step overhead ~0.35 us) and a multiple
    of 16 (bf16 sublane packing).
    """
    if B <= min_tile:
        return B
    tb = _round_up(pl.cdiv(B, target_steps), 16)
    return max(min_tile, min(tb, max_tile))


def generator_forward(x, w1_t, b1, w2_t, b2, *, leaky_relu_slope=0.2,
                      compute_dtype=jnp.bfloat16, out_dtype=jnp.bfloat16,
                      max_batch_tile=2048, buffer_depth=None):
    """x: (B, noise_dim); w1_t: (noise_dim, hidden); b1: (1, hidden);
    w2_t: (hidden, input_size); b2: (1, input_size). Returns (B, input_size).

    buffer_depth: optional deeper pipelining (pl.Buffered) on the x/out
    streams; only applied when the grid has enough steps.  Mainly useful on
    v5e where HBM latency exposure hurts most.
    """
    B, noise_dim = x.shape
    hidden = w1_t.shape[1]
    out_dim = w2_t.shape[1]

    # Cast MXU operands to the compute dtype (bf16 by default); keep biases
    # and all elementwise math in f32.
    xc = x.astype(compute_dtype)
    w1c = w1_t.astype(compute_dtype)
    w2c = w2_t.astype(compute_dtype)
    b1c = b1.astype(jnp.float32)
    b2c = b2.astype(jnp.float32)

    TB = _choose_batch_tile(B, max_tile=max_batch_tile)
    num_steps = pl.cdiv(B, TB)
    grid = (num_steps,)

    kernel = functools.partial(generator_kernel, slope=leaky_relu_slope)

    itemsize = lambda a: a.size * a.dtype.itemsize
    cost = pl.CostEstimate(
        flops=2 * B * (noise_dim * hidden + hidden * out_dim),
        transcendentals=B * out_dim,  # tanh
        bytes_accessed=(itemsize(xc) + itemsize(w1c) + itemsize(b1c)
                        + itemsize(w2c) + itemsize(b2c)
                        + B * out_dim * jnp.dtype(out_dtype).itemsize),
    )

    # Streaming x / output tiles; weights & biases resident via (0, 0) maps.
    x_kwargs = {}
    out_kwargs = {}
    if buffer_depth is not None and num_steps >= buffer_depth + 1:
        x_kwargs = dict(pipeline_mode=pl.Buffered(buffer_depth))
        out_kwargs = dict(pipeline_mode=pl.Buffered(buffer_depth))

    x_spec = pl.BlockSpec((TB, noise_dim), lambda i: (i, 0), **x_kwargs)
    out_spec = pl.BlockSpec((TB, out_dim), lambda i: (i, 0), **out_kwargs)

    return pl.pallas_call(
        kernel,
        out_shape=jax.ShapeDtypeStruct((B, out_dim), out_dtype),
        grid_spec=pl.GridSpec(
            grid=grid,
            in_specs=[
                x_spec,                                               # x tile
                pl.BlockSpec((noise_dim, hidden), lambda i: (0, 0)),  # W1 (resident)
                pl.BlockSpec((1, hidden), lambda i: (0, 0)),          # b1 (resident)
                pl.BlockSpec((hidden, out_dim), lambda i: (0, 0)),    # W2 (resident)
                pl.BlockSpec((1, out_dim), lambda i: (0, 0)),         # b2 (resident)
            ],
            out_specs=out_spec,
        ),
        compiler_params=pltpu.CompilerParams(
            dimension_semantics=("parallel",)),
        cost_estimate=cost,
    )(xc, w1c, b1c, w2c, b2c)


def generator_reference(x, w1_t, b1, w2_t, b2, *, leaky_relu_slope=0.2):
    h = x @ w1_t + b1
    h = jnp.where(h >= 0, h, leaky_relu_slope * h)
    o = h @ w2_t + b2
    return jnp.tanh(o)


if __name__ == "__main__":
    # Shapes consistent with the module's forward:
    # params.noise_dim=32, params.hidden_size=64, params.input_size=128, batch=8
    batch, noise_dim, hidden_size, input_size = 8, 32, 64, 128
    leaky_relu_slope = 0.2

    key = jax.random.PRNGKey(0)
    kx, kw1, kb1, kw2, kb2 = jax.random.split(key, 5)

    x = jax.random.normal(kx, (batch, noise_dim), dtype=jnp.float32)

    # PyTorch Linear stores weight as (out, in); the kernel takes the
    # transposed (in, out) layout so it can do x @ W on the MXU.
    bound1 = 1.0 / jnp.sqrt(noise_dim)
    w1_t = jax.random.uniform(kw1, (noise_dim, hidden_size), jnp.float32,
                              -bound1, bound1)
    b1 = jax.random.uniform(kb1, (1, hidden_size), jnp.float32, -bound1, bound1)

    bound2 = 1.0 / jnp.sqrt(hidden_size)
    w2_t = jax.random.uniform(kw2, (hidden_size, input_size), jnp.float32,
                              -bound2, bound2)
    b2 = jax.random.uniform(kb2, (1, input_size), jnp.float32, -bound2, bound2)

    ref = generator_reference(x, w1_t, b1, w2_t, b2,
                              leaky_relu_slope=leaky_relu_slope)

    # 1) f32 compute + f32 output path (tight tolerance).
    out_f32 = generator_forward(x, w1_t, b1, w2_t, b2,
                                leaky_relu_slope=leaky_relu_slope,
                                compute_dtype=jnp.float32,
                                out_dtype=jnp.float32)
    out_f32 = jax.block_until_ready(out_f32)
    assert out_f32.shape == (batch, input_size)
    assert jnp.allclose(out_f32, ref, atol=1e-5, rtol=1e-5)

    # 2) Default fast path: bf16 MXU operands + bf16 output (loose tolerance).
    out_fast = generator_forward(x, w1_t, b1, w2_t, b2,
                                 leaky_relu_slope=leaky_relu_slope)
    out_fast = jax.block_until_ready(out_fast)
    assert out_fast.shape == (batch, input_size)
    assert out_fast.dtype == jnp.bfloat16
    assert jnp.allclose(out_fast.astype(jnp.float32), ref, atol=4e-2, rtol=0)

    # 3) Large batch: exercises the multi-step tiled / "parallel" grid path
    #    (B=4096 -> TB=688 -> 6 grid steps: >=3 per TensorCore on v7x, and the
    #    output writeback overlaps the next tile's compute on v5e/v6e).
    big_B = 4096
    xb = jax.random.normal(jax.random.PRNGKey(1), (big_B, noise_dim),
                           dtype=jnp.float32)
    out_big = generator_forward(xb, w1_t, b1, w2_t, b2,
                                leaky_relu_slope=leaky_relu_slope)
    out_big = jax.block_until_ready(out_big)
    ref_big = generator_reference(xb, w1_t, b1, w2_t, b2,
                                  leaky_relu_slope=leaky_relu_slope)
    assert out_big.shape == (big_B, input_size)
    assert jnp.allclose(out_big.astype(jnp.float32), ref_big, atol=4e-2, rtol=0)

    # 4) Ragged batch (B % TB != 0): last block is partial; only the first B
    #    output rows are written/consumed.
    rag_B = 2500
    xr = jax.random.normal(jax.random.PRNGKey(2), (rag_B, noise_dim),
                           dtype=jnp.float32)
    out_rag = generator_forward(xr, w1_t, b1, w2_t, b2,
                                leaky_relu_slope=leaky_relu_slope)
    out_rag = jax.block_until_ready(out_rag)
    ref_rag = generator_reference(xr, w1_t, b1, w2_t, b2,
                                  leaky_relu_slope=leaky_relu_slope)
    assert out_rag.shape == (rag_B, input_size)
    assert jnp.allclose(out_rag.astype(jnp.float32), ref_rag, atol=4e-2, rtol=0)

    print("KERNEL_OK")
</pallas_src>

<mosaic_0001>
module attributes {stable_mosaic.version = 11 : i64} {
  func.func @generator_kernel(%arg0: i32, %arg1: memref<8x32xf32, #tpu.memory_space<vmem>>, %arg2: memref<32x64xf32, #tpu.memory_space<vmem>>, %arg3: memref<1x64xf32, #tpu.memory_space<vmem>>, %arg4: memref<64x128xf32, #tpu.memory_space<vmem>>, %arg5: memref<1x128xf32, #tpu.memory_space<vmem>>, %arg6: memref<8x128xf32, #tpu.memory_space<vmem>>) attributes {dimension_semantics = [#tpu.dimension_semantics<parallel>], iteration_bounds = array<i64: 1>, scalar_prefetch = 0 : i64, scratch_operands = 0 : i64, tpu.core_type = #tpu.core_type<tc>, window_params = [{transform_indices = @transform_0, window_bounds = array<i64: 8, 32>}, {pipeline_mode = #tpu.pipeline_mode<synchronous>, transform_indices = @transform_1, window_bounds = array<i64: 32, 64>}, {pipeline_mode = #tpu.pipeline_mode<synchronous>, transform_indices = @transform_2, window_bounds = array<i64: 1, 64>}, {pipeline_mode = #tpu.pipeline_mode<synchronous>, transform_indices = @transform_3, window_bounds = array<i64: 64, 128>}, {pipeline_mode = #tpu.pipeline_mode<synchronous>, transform_indices = @transform_4, window_bounds = array<i64: 1, 128>}, {transform_indices = @transform_5, window_bounds = array<i64: 8, 128>}]} {
    %c0 = arith.constant 0 : index
    %c0_0 = arith.constant 0 : index
    %0 = vector.load %arg1[%c0, %c0_0] : memref<8x32xf32, #tpu.memory_space<vmem>>, vector<8x32xf32>
    %c0_1 = arith.constant 0 : index
    %c0_2 = arith.constant 0 : index
    %1 = vector.load %arg2[%c0_1, %c0_2] : memref<32x64xf32, #tpu.memory_space<vmem>>, vector<32x64xf32>
    %cst = arith.constant dense<0.000000e+00> : vector<8x64xf32>
    %2 = tpu.matmul %0, %1, %cst {dimension_numbers = #tpu.dot_dimension_numbers<[1], [0], [0], [1], [0, 0, 1, 1], [], []>} : vector<8x32xf32>, vector<32x64xf32>, vector<8x64xf32> -> vector<8x64xf32>
    %c0_3 = arith.constant 0 : index
    %c0_4 = arith.constant 0 : index
    %3 = vector.load %arg3[%c0_3, %c0_4] : memref<1x64xf32, #tpu.memory_space<vmem>>, vector<1x64xf32>
    %4 = vector.broadcast %3 : vector<1x64xf32> to vector<8x64xf32>
    %5 = arith.addf %2, %4 : vector<8x64xf32>
    %cst_5 = arith.constant 2.000000e-01 : f32
    %6 = vector.broadcast %cst_5 : f32 to vector<8x64xf32>
    %7 = arith.mulf %6, %5 : vector<8x64xf32>
    %8 = arith.maximumf %5, %7 : vector<8x64xf32>
    %c0_6 = arith.constant 0 : index
    %c0_7 = arith.constant 0 : index
    %9 = vector.load %arg4[%c0_6, %c0_7] : memref<64x128xf32, #tpu.memory_space<vmem>>, vector<64x128xf32>
    %cst_8 = arith.constant dense<0.000000e+00> : vector<8x128xf32>
    %10 = tpu.matmul %8, %9, %cst_8 {dimension_numbers = #tpu.dot_dimension_numbers<[1], [0], [0], [1], [0, 0, 1, 1], [], []>} : vector<8x64xf32>, vector<64x128xf32>, vector<8x128xf32> -> vector<8x128xf32>
    %c0_9 = arith.constant 0 : index
    %c0_10 = arith.constant 0 : index
    %11 = vector.load %arg5[%c0_9, %c0_10] : memref<1x128xf32, #tpu.memory_space<vmem>>, vector<1x128xf32>
    %12 = vector.broadcast %11 : vector<1x128xf32> to vector<8x128xf32>
    %13 = arith.addf %10, %12 : vector<8x128xf32>
    %14 = math.tanh %13 : vector<8x128xf32>
    %c0_11 = arith.constant 0 : index
    %c0_12 = arith.constant 0 : index
    %15 = vector.load %arg6[%c0_11, %c0_12] : memref<8x128xf32, #tpu.memory_space<vmem>>, vector<8x128xf32>
    tpu.vector_store %arg6[%c0_11, %c0_12], %14 {strides = array<i32>} : memref<8x128xf32, #tpu.memory_space<vmem>>, vector<8x128xf32>,
    return
  }
  func.func @transform_0(%arg0: i32) -> (i32, i32) {
    %c0_i32 = arith.constant 0 : i32
    %c0_i32_0 = arith.constant 0 : i32
    return %arg0, %c0_i32 : i32, i32
  }
  func.func @transform_1(%arg0: i32) -> (i32, i32) {
    %c0_i32 = arith.constant 0 : i32
    %c0_i32_0 = arith.constant 0 : i32
    %c0_i32_1 = arith.constant 0 : i32
    return %c0_i32, %c0_i32_0 : i32, i32
  }
  func.func @transform_2(%arg0: i32) -> (i32, i32) {
    %c0_i32 = arith.constant 0 : i32
    %c0_i32_0 = arith.constant 0 : i32
    %c0_i32_1 = arith.constant 0 : i32
    return %c0_i32, %c0_i32_0 : i32, i32
  }
  func.func @transform_3(%arg0: i32) -> (i32, i32) {
    %c0_i32 = arith.constant 0 : i32
    %c0_i32_0 = arith.constant 0 : i32
    %c0_i32_1 = arith.constant 0 : i32
    return %c0_i32, %c0_i32_0 : i32, i32
  }
  func.func @transform_4(%arg0: i32) -> (i32, i32) {
    %c0_i32 = arith.constant 0 : i32
    %c0_i32_0 = arith.constant 0 : i32
    %c0_i32_1 = arith.constant 0 : i32
    return %c0_i32, %c0_i32_0 : i32, i32
  }
  func.func @transform_5(%arg0: i32) -> (i32, i32) {
    %c0_i32 = arith.constant 0 : i32
    %c0_i32_0 = arith.constant 0 : i32
    return %arg0, %c0_i32 : i32, i32
  }
}

</mosaic_0001>

<llo_original>
// kernel: tpu_custom_call.1
$region0: #{tpu_custom_call.1}
  #allocation0 [shape = 'u32[]', space=smem, size = 0x4, offset = 0x4, fixed_abs, tag = 'smem constant byte address 0x4 - core index']
  #allocation1 [shape = 'u32[72,128]{1,0:T(1,128)}', space=vmem, size = 0x9000, scoped, tag = 'internal scratch']
  %s0 = inlined_call_operand.hbm [shape: f32[8,32], index: 0, kind: input, shape index: {}]
  %s1 = inlined_call_operand.hbm [shape: f32[32,64], index: 1, kind: input, shape index: {}]
  %s2 = inlined_call_operand.vmem [shape: f32[1,64], index: 2, kind: input, shape index: {}]
  %s3 = inlined_call_operand.hbm [shape: f32[64,128], index: 3, kind: input, shape index: {}]
  %s4 = inlined_call_operand.vmem [shape: f32[1,128], index: 4, kind: input, shape index: {}]
  %s5 = inlined_call_operand.hbm [shape: f32[8,128], index: 5, kind: output, shape index: {}]
  %s6 = sld [smem:[#allocation0]]
  $region42: #{tpu_custom_call.1} parent=0
    _
  %s8 = ssub.s32 1, %s6
  %s9 = scalar_select 0, %s8, %s6
  $region1: #{tpu_custom_call.1} parent=0
    #allocation2 [shape = 'u8[4096]{0}', space=vmem, size = 0x1000, scoped, tag = 'input window, operand 0, single buffered']
    #allocation3 [shape = 's32[1]{0}', space=sflag, size = 0x4, scoped, tag = 'scoped memory for tpu_custom_call.1']
    #allocation4 [shape = 's32[1]{0}', space=sflag, size = 0x4, scoped, tag = 'scoped memory for tpu_custom_call.1']
    #allocation5 [shape = 'u8[16384]{0}', space=vmem, size = 0x4000, scoped, tag = 'input window, operand 1, single buffered']
    #allocation6 [shape = 's32[1]{0}', space=sflag, size = 0x4, scoped, tag = 'scoped memory for tpu_custom_call.1']
    #allocation7 [shape = 'u8[32768]{0}', space=vmem, size = 0x8000, scoped, tag = 'input window, operand 3, single buffered']
    #allocation8 [shape = 'u8[4096]{0}', space=vmem, size = 0x1000, scoped, tag = 'output window, operand 0, single buffered']
    %10 = vsyncpa [#allocation3], 0
    %11 = vsyncpa [#allocation6], 0
    %12 = vsyncpa [#allocation4], 0
    // Predicated region
    $region2: #{tpu_custom_call.1} parent=1 // pred_check
      _
    $region3: #{tpu_custom_call.1} parent=1 // pred_check_branch
      %14 = sbr.rel (0) target = $region5
    $region4: #{tpu_custom_call.1} parent=1 // pred_region
      %16 = vsyncadd [#allocation3], 0
      %s18 = sshll.u32 %s0, 4
      %s19 = int_to_ptr.hbm [resolvable:$true] %s18
      %s20 = sshll.u32 [#allocation2], 4
      %s21 = int_to_ptr.vmem [resolvable:$true] %s20
      %23 = dma.hbm_to_vmem [thread:$0]  %s19, 128, %s21, [#allocation3]
    $region5: #{tpu_custom_call.1} parent=1 // pred_fallthru
      _
    // Predicated region
    $region6: #{tpu_custom_call.1} parent=1 // pred_check
      _
    $region7: #{tpu_custom_call.1} parent=1 // pred_check_branch
      %25 = sbr.rel (0) target = $region9
    $region8: #{tpu_custom_call.1} parent=1 // pred_region
      %27 = vsyncadd [#allocation6], 0
      %s28 = sshll.u32 %s1, 4
      %s29 = int_to_ptr.hbm [resolvable:$true] %s28
      %s30 = sshll.u32 [#allocation5], 4
      %s31 = int_to_ptr.vmem [resolvable:$true] %s30
      %36 = dma.hbm_to_vmem [thread:$0]  %s29, 512, %s31, [#allocation6], 128, 128, 8
    $region9: #{tpu_custom_call.1} parent=1 // pred_fallthru
      _
    // Predicated region
    $region10: #{tpu_custom_call.1} parent=1 // pred_check
      _
    $region11: #{tpu_custom_call.1} parent=1 // pred_check_branch
      %38 = sbr.rel (0) target = $region13
    $region12: #{tpu_custom_call.1} parent=1 // pred_region
      _
    $region13: #{tpu_custom_call.1} parent=1 // pred_fallthru
      _
    // Predicated region
    $region14: #{tpu_custom_call.1} parent=1 // pred_check
      _
    $region15: #{tpu_custom_call.1} parent=1 // pred_check_branch
      %40 = sbr.rel (0) target = $region17
    $region16: #{tpu_custom_call.1} parent=1 // pred_region
      %42 = vsyncadd [#allocation6], 0
      %s43 = sshll.u32 %s3, 4
      %s44 = int_to_ptr.hbm [resolvable:$true] %s43
      %s45 = sshll.u32 [#allocation7], 4
      %s46 = int_to_ptr.vmem [resolvable:$true] %s45
      %51 = dma.hbm_to_vmem [thread:$0]  %s44, 1024, %s46, [#allocation6], 128, 128, 8
    $region17: #{tpu_custom_call.1} parent=1 // pred_fallthru
      _
    // Predicated region
    $region18: #{tpu_custom_call.1} parent=1 // pred_check
      _
    $region19: #{tpu_custom_call.1} parent=1 // pred_check_branch
      %53 = sbr.rel (0) target = $region21
    $region20: #{tpu_custom_call.1} parent=1 // pred_region
      _
    $region21: #{tpu_custom_call.1} parent=1 // pred_fallthru
      _
    // Predicated region
    $region22: #{tpu_custom_call.1} parent=1 // pred_check
      _
    $region23: #{tpu_custom_call.1} parent=1 // pred_check_branch
      %55 = sbr.rel (0) target = $region25
    $region24: #{tpu_custom_call.1} parent=1 // pred_region
      %57 = dma.done [#allocation3], 128
    $region25: #{tpu_custom_call.1} parent=1 // pred_fallthru
      _
    // Predicated region
    $region26: #{tpu_custom_call.1} parent=1 // pred_check
      _
    $region27: #{tpu_custom_call.1} parent=1 // pred_check_branch
      %59 = sbr.rel (0) target = $region29
    $region28: #{tpu_custom_call.1} parent=1 // pred_region
      %61 = dma.done [#allocation6], 512
    $region29: #{tpu_custom_call.1} parent=1 // pred_fallthru
      _
    // Predicated region
    $region30: #{tpu_custom_call.1} parent=1 // pred_check
      _
    $region31: #{tpu_custom_call.1} parent=1 // pred_check_branch
      %63 = sbr.rel (0) target = $region33
    $region32: #{tpu_custom_call.1} parent=1 // pred_region
      %65 = dma.done [#allocation6], 1024
    $region33: #{tpu_custom_call.1} parent=1 // pred_fallthru
      _
    %v66 = vld [vmem:[#allocation2] sm:$0xff]
    %v67 = vld [vmem:[#allocation5] sm:$0xff]
    %v68 = vld [vmem:[#allocation5 + $0x8] sm:$0xff]
    %v69 = vld [vmem:[#allocation5 + $0x10] sm:$0xff]
    %v70 = vld [vmem:[#allocation5 + $0x18] sm:$0xff]
    %v71 = vld [vmem:[%s2] sm:$0x1]
    %v73 = vperm.slane %v71, 0
    %vm75 = vcmask 261120
    %v77 = vsel %vm75, %v66, 0
    %79 = vmatpush.msra.mxu0 0.0
    %80 = vmatpush.msra.mxu0 0.0
    %81 = vmatpush.msra.mxu0 0.0
    %82 = vmatpush.msra.mxu0 0.0
    %83 = vmatpush.msra.mxu0 0.0
    %84 = vmatpush.msra.mxu0 0.0
    %85 = vmatpush.msra.mxu0 0.0
    %86 = vmatpush.msra.mxu0 0.0
    %87 = vmatpush.msra.mxu0 0.0
    %88 = vmatpush.msra.mxu0 0.0
    %89 = vmatpush.msra.mxu0 0.0
    %90 = vmatpush.msra.mxu0 0.0
    %91 = vmatpush.msra.mxu0 %v70
    %92 = vmatpush.msra.mxu0 %v69
    %93 = vmatpush.msra.mxu0 %v68
    %94 = vmatpush.msra.mxu0 %v67
    %95 = vmatmul.f32.gmra.mxu0 %v77
    %v96 = vpop.f32.mrf.mxu0
    %v97 = vadd.f32 %v73, %v96
    %98 = vdwg.mxu0
    %v99 = vmul.f32 %v97, 0.2
    %v100 = vmax.f32 %v97, %v99
    %v101 = vld [vmem:[#allocation7] sm:$0xff]
    %v102 = vld [vmem:[#allocation7 + $0x8] sm:$0xff]
    %v103 = vld [vmem:[#allocation7 + $0x10] sm:$0xff]
    %v104 = vld [vmem:[#allocation7 + $0x18] sm:$0xff]
    %v105 = vld [vmem:[#allocation7 + $0x20] sm:$0xff]
    %v106 = vld [vmem:[#allocation7 + $0x28] sm:$0xff]
    %v107 = vld [vmem:[#allocation7 + $0x30] sm:$0xff]
    %v108 = vld [vmem:[#allocation7 + $0x38] sm:$0xff]
    %v109 = vld [vmem:[%s4] sm:$0x1]
    %v111 = vperm.slane %v109, 0
    %vm113 = vcmask 523264
    %v115 = vsel %vm113, %v100, 0
    %117 = vmatpush.msra.mxu0 0.0
    %118 = vmatpush.msra.mxu0 0.0
    %119 = vmatpush.msra.mxu0 0.0
    %120 = vmatpush.msra.mxu0 0.0
    %121 = vmatpush.msra.mxu0 0.0
    %122 = vmatpush.msra.mxu0 0.0
    %123 = vmatpush.msra.mxu0 0.0
    %124 = vmatpush.msra.mxu0 0.0
    %125 = vmatpush.msra.mxu0 %v108
    %126 = vmatpush.msra.mxu0 %v107
    %127 = vmatpush.msra.mxu0 %v106
    %128 = vmatpush.msra.mxu0 %v105
    %129 = vmatpush.msra.mxu0 %v104
    %130 = vmatpush.msra.mxu0 %v103
    %131 = vmatpush.msra.mxu0 %v102
    %132 = vmatpush.msra.mxu0 %v101
    %133 = vmatmul.f32.gmra.mxu0 %v115
    %v134 = vpop.f32.mrf.mxu0
    %v135 = vadd.f32 %v111, %v134
    %136 = vdwg.mxu0
    %v137 = vtanh.pop %v135
    %138 = vst [vmem:[#allocation8] sm:$0xff] %v137
    // Predicated region
    $region34: #{tpu_custom_call.1} parent=1 // pred_check
      _
    $region35: #{tpu_custom_call.1} parent=1 // pred_check_branch
      %140 = sbr.rel (0) target = $region37
    $region36: #{tpu_custom_call.1} parent=1 // pred_region
      %142 = vsyncadd [#allocation4], 0
      %s144 = sshll.u32 [#allocation8], 4
      %s145 = int_to_ptr.vmem [resolvable:$true] %s144
      %s146 = sshll.u32 %s5, 4
      %s147 = int_to_ptr.hbm [resolvable:$true] %s146
      %149 = dma.vmem_to_hbm [thread:$0]  %s145, 128, %s147, [#allocation4]
    $region37: #{tpu_custom_call.1} parent=1 // pred_fallthru
      _
    // Predicated region
    $region38: #{tpu_custom_call.1} parent=1 // pred_check
      _
    $region39: #{tpu_custom_call.1} parent=1 // pred_check_branch
      %151 = sbr.rel (0) target = $region41
    $region40: #{tpu_custom_call.1} parent=1 // pred_region
      %153 = dma.done [#allocation4], 128
    $region41: #{tpu_custom_call.1} parent=1 // pred_fallthru
      _
    %154 = vsyncpa [#allocation3], 1
    %155 = vsyncpa [#allocation6], 1
    %156 = vsyncpa [#allocation4], 1

</llo_original>
